<compile_context>
chip_gen: v7x
topology: tpu7x:2x2x1
jax: 0.10.0
libtpu: 0.0.40
codegen_flags: <defaults>
</compile_context>

<pallas_src>
import math
import functools

import numpy as np
import jax
import jax.numpy as jnp
from jax.experimental import pallas as pl
from jax.experimental.pallas import tpu as pltpu


def _round_up(n, m):
    return ((n + m - 1) // m) * m


def seq_classifier_kernel(idx_ref, const_ref, out_ref, *, V, T, C, w2_row, b2_row):
    B = idx_ref.shape[0]

    # Static views into the packed constant buffer (8-row aligned segments).
    e1_col = const_ref[0:V, 0:1]                    # (V, 1)  emb @ W1.T
    w2t = const_ref[w2_row:w2_row + T, 0:C]         # (T, C)  L2 weight, transposed
    b2pp = const_ref[b2_row:b2_row + B, 0:C]        # (B, C)  b2 + b1 + PE folds

    # --- Embedding + L1 (folded): y[b,t] = e1[idx[b,t]] ---
    # One-hot select + sublane reduce (VPU compare/select + XLU reduce); no N=1 MXU push,
    # result lands directly as a lane-major (B, T) tile for the L2 matmul.
    idx_b = idx_ref[...][:, None, :]                                   # (B, 1, T)
    vocab = jax.lax.broadcasted_iota(jnp.int32, (B, V, T), 1)          # (B, V, T)
    picked = jnp.where(idx_b == vocab, e1_col.reshape(1, V, 1), 0.0)   # (B, V, T)
    y = jnp.sum(picked, axis=1)                                        # (B, T)
    # TODO(synk): nn.Dropout(p=0.1) treated as identity (eval mode); a training-mode kernel
    #             would need pltpu.prng_seed / prng_random_bits masking.

    # --- L2 (PE, b1 already folded into b2pp): z = y @ W2.T + b2pp ---
    z = jnp.dot(y, w2t, preferred_element_type=jnp.float32) + b2pp     # (B, C)

    # --- Softmax over dim=1 ---
    m = jnp.max(z, axis=1, keepdims=True)
    e = jnp.exp(z - m)
    out_ref[...] = e * (1.0 / jnp.sum(e, axis=1, keepdims=True))


def make_positional_encoding(n_rows, text_len):
    """PositionalEncoding300k.pe[:n_rows, :, 0] — the per-(pos, col) scalar (broadcast over 300)."""
    position = jnp.arange(n_rows, dtype=jnp.float32)[:, None]                  # (n, 1)
    div_term = jnp.exp(jnp.arange(0, text_len, 2, dtype=jnp.float32)
                       * (-math.log(10000.0) / text_len))                      # (ceil(T/2),)
    angles = position * div_term                                               # (n, ceil(T/2))
    pe = jnp.zeros((n_rows, text_len), jnp.float32)
    pe = pe.at[:, 0::2].set(jnp.sin(angles))
    pe = pe.at[:, 1::2].set(jnp.cos(angles[:, : text_len // 2]))
    return pe


def prepare_params(emb, pe, w1, b1, w2, b2):
    """One-time algebraic folds; packs every f32 constant into ONE dense VMEM operand.

    emb (V,D); pe (B,T); w1 (1,D); b1 (1,); w2 (C,T); b2 (C,).
    Returns (const, meta) in the kernel layout documented above.
    NOTE: pe-dependent folds bake in the static B, T — re-run prepare_params if they change.
    """
    V, D = emb.shape
    C, T = w2.shape
    B = pe.shape[0]

    e1 = jnp.dot(emb, w1.reshape(D, 1))                              # (V, 1)   emb @ W1.T
    s = jnp.sum(w1)                                                  # scalar   sum(W1)
    w2t = w2.T.astype(jnp.float32)                                   # (T, C)
    b2pp = (b2[None, :] + b1[0] * jnp.sum(w2, axis=1)[None, :]
            + s * (pe @ w2.T)).astype(jnp.float32)                   # (B, C)

    w2_row = _round_up(V, 8)
    b2_row = w2_row + _round_up(T, 8)
    rows = b2_row + B
    width = max(C, 1)
    const = jnp.zeros((rows, width), jnp.float32)
    const = const.at[0:V, 0:1].set(e1.astype(jnp.float32))
    const = const.at[w2_row:w2_row + T, 0:C].set(w2t)
    const = const.at[b2_row:b2_row + B, 0:C].set(b2pp)
    meta = dict(V=int(V), T=int(T), C=int(C), w2_row=int(w2_row), b2_row=int(b2_row))
    return const, meta


def seq_classifier_forward(idx, const, meta):
    """idx (B,T) int; const/meta from prepare_params(). Single no-grid pallas_call."""
    B, T = idx.shape
    assert T == meta["T"], "re-run prepare_params for a different sequence length"
    C = meta["C"]
    kernel = functools.partial(
        seq_classifier_kernel,
        V=meta["V"], T=meta["T"], C=C, w2_row=meta["w2_row"], b2_row=meta["b2_row"],
    )
    return pl.pallas_call(
        kernel,
        out_shape=jax.ShapeDtypeStruct((B, C), jnp.float32),
        in_specs=[pl.BlockSpec(memory_space=pltpu.MemorySpace.VMEM)] * 2,
        out_specs=pl.BlockSpec(memory_space=pltpu.MemorySpace.VMEM),
    )(idx.astype(jnp.int32), const)


def reference_forward(idx, emb, pe, w1, b1, w2, b2):
    """Pure-JAX reference on the ORIGINAL (unfolded) parameters."""
    x = emb[idx]                                   # (B, T, D)
    x = x + pe[:, :, None]                         # PE indexed by batch; dropout identity (eval)
    y = (x @ w1.T + b1)[..., 0]                    # (B, T)
    z = y @ w2.T + b2                              # (B, C)
    return jax.nn.softmax(z, axis=1)


if __name__ == "__main__":
    # T=30 (L2 in-features), D=300 (L1 in-features), C=150 (L2 out-features) fixed by the module.
    B, T, D, V, C = 4, 30, 300, 64, 150
    k0, k1, k2, k3, k4, k5 = jax.random.split(jax.random.PRNGKey(0), 6)

    idx = jax.random.randint(k0, (B, T), 0, V, dtype=jnp.int32)        # embedded_split_text
    # intent_one_hot is an unused forward argument in the PyTorch module — omitted.
    emb = jax.random.normal(k1, (V, D), jnp.float32) * 0.1             # Embedding.from_pretrained
    w1 = jax.random.normal(k2, (1, D), jnp.float32) * (1.0 / math.sqrt(D))   # L1.weight
    b1 = jax.random.normal(k3, (1,), jnp.float32) * 0.01                     # L1.bias
    w2 = jax.random.normal(k4, (C, T), jnp.float32) * (1.0 / math.sqrt(T))   # L2.weight
    b2 = jax.random.normal(k5, (C,), jnp.float32) * 0.01                     # L2.bias
    pe = make_positional_encoding(B, T)

    const, meta = prepare_params(emb, pe, w1, b1, w2, b2)              # one-time folds + packing
    out = jax.block_until_ready(seq_classifier_forward(idx, const, meta))

    ref = reference_forward(idx, emb, pe, w1, b1, w2, b2)
    assert out.shape == (B, C)
    np.testing.assert_allclose(np.asarray(out), np.asarray(ref), atol=1e-5, rtol=1e-5)
    print("KERNEL_OK")
</pallas_src>

<mosaic_0001>
module attributes {stable_mosaic.version = 11 : i64} {
  func.func @seq_classifier_kernel(%arg0: memref<4x30xi32, #tpu.memory_space<vmem>>, %arg1: memref<100x150xf32, #tpu.memory_space<vmem>>, %arg2: memref<4x150xf32, #tpu.memory_space<vmem>>) attributes {dimension_semantics = [], scalar_prefetch = 0 : i64, scratch_operands = 0 : i64, tpu.core_type = #tpu.core_type<tc>} {
    %c0 = arith.constant 0 : index
    %c0_0 = arith.constant 0 : index
    %0 = vector.load %arg1[%c0, %c0_0] : memref<100x150xf32, #tpu.memory_space<vmem>>, vector<64x1xf32>
    %c64 = arith.constant 64 : index
    %c0_1 = arith.constant 0 : index
    %1 = vector.load %arg1[%c64, %c0_1] : memref<100x150xf32, #tpu.memory_space<vmem>>, vector<30x150xf32>
    %c96 = arith.constant 96 : index
    %c0_2 = arith.constant 0 : index
    %2 = vector.load %arg1[%c96, %c0_2] : memref<100x150xf32, #tpu.memory_space<vmem>>, vector<4x150xf32>
    %c0_3 = arith.constant 0 : index
    %c0_4 = arith.constant 0 : index
    %3 = vector.load %arg0[%c0_3, %c0_4] : memref<4x30xi32, #tpu.memory_space<vmem>>, vector<4x30xi32>
    %4 = vector.shape_cast %3 : vector<4x30xi32> to vector<4x1x30xi32>
    %5 = tpu.iota {dimensions = array<i32: 1>} : vector<4x64x30xi32>
    %6 = vector.broadcast %4 : vector<4x1x30xi32> to vector<4x64x30xi32>
    %7 = arith.cmpi eq, %6, %5 : vector<4x64x30xi32>
    %8 = vector.shape_cast %0 : vector<64x1xf32> to vector<1x64x1xf32>
    %cst = arith.constant 0.000000e+00 : f32
    %9 = vector.shape_cast %8 : vector<1x64x1xf32> to vector<1x64x1xf32>
    %10 = vector.broadcast %9 : vector<1x64x1xf32> to vector<4x64x30xf32>
    %11 = vector.broadcast %cst : f32 to vector<4x64x30xf32>
    %12 = arith.select %7, %10, %11 : vector<4x64x30xi1>, vector<4x64x30xf32>
    %cst_5 = arith.constant dense<0.000000e+00> : vector<4x30xf32>
    %13 = vector.multi_reduction <add>, %12, %cst_5 [1] : vector<4x64x30xf32> to vector<4x30xf32>
    %cst_6 = arith.constant dense<0.000000e+00> : vector<4x150xf32>
    %14 = tpu.matmul %13, %1, %cst_6 {dimension_numbers = #tpu.dot_dimension_numbers<[1], [0], [0], [1], [0, 0, 1, 1], [], []>} : vector<4x30xf32>, vector<30x150xf32>, vector<4x150xf32> -> vector<4x150xf32>
    %15 = arith.addf %14, %2 : vector<4x150xf32>
    %cst_7 = arith.constant dense<0xFF800000> : vector<4xf32>
    %16 = vector.multi_reduction <maximumf>, %15, %cst_7 [1] : vector<4x150xf32> to vector<4xf32>
    %17 = vector.shape_cast %16 : vector<4xf32> to vector<4x1xf32>
    %18 = vector.broadcast %17 : vector<4x1xf32> to vector<4x150xf32>
    %19 = arith.subf %15, %18 : vector<4x150xf32>
    %20 = math.exp %19 : vector<4x150xf32>
    %cst_8 = arith.constant dense<0.000000e+00> : vector<4xf32>
    %21 = vector.multi_reduction <add>, %20, %cst_8 [1] : vector<4x150xf32> to vector<4xf32>
    %22 = vector.shape_cast %21 : vector<4xf32> to vector<4x1xf32>
    %cst_9 = arith.constant 1.000000e+00 : f32
    %23 = vector.broadcast %cst_9 : f32 to vector<4x1xf32>
    %24 = arith.divf %23, %22 : vector<4x1xf32>
    %25 = vector.broadcast %24 : vector<4x1xf32> to vector<4x150xf32>
    %26 = arith.mulf %20, %25 : vector<4x150xf32>
    %c0_10 = arith.constant 0 : index
    %c0_11 = arith.constant 0 : index
    %27 = vector.load %arg2[%c0_10, %c0_11] : memref<4x150xf32, #tpu.memory_space<vmem>>, vector<4x150xf32>
    tpu.vector_store %arg2[%c0_10, %c0_11], %26 {strides = array<i32>} : memref<4x150xf32, #tpu.memory_space<vmem>>, vector<4x150xf32>,
    return
  }
}

</mosaic_0001>

<llo_original>
// kernel: tpu_custom_call.1
$region0: #{tpu_custom_call.1}
  #allocation0 [shape = 'u32[]', space=smem, size = 0x4, offset = 0x4, fixed_abs, tag = 'smem constant byte address 0x4 - core index']
  #allocation1 [shape = 'u32[144,128]{1,0:T(1,128)}', space=vmem, size = 0x12000, scoped, tag = 'internal scratch']
  %s0 = inlined_call_operand.vmem [shape: s32[4,30], index: 0, kind: input, shape index: {}]
  %s1 = inlined_call_operand.vmem [shape: f32[100,150], index: 1, kind: input, shape index: {}]
  %s2 = inlined_call_operand.hbm [shape: f32[4,150], index: 2, kind: output, shape index: {}]
  %s3 = sld [smem:[#allocation0]]
  $region18: #{tpu_custom_call.1} parent=0
    _
  %s5 = ssub.s32 1, %s3
  %s6 = scalar_select 0, %s5, %s3
  $region1: #{tpu_custom_call.1} parent=0
    #allocation2 [shape = 'u8[4096]{0}', space=vmem, size = 0x1000, scoped, tag = 'output window, operand 0, single buffered']
    #allocation3 [shape = 's32[1]{0}', space=sflag, size = 0x4, scoped, tag = 'scoped memory for tpu_custom_call.1']
    %7 = vsyncpa [#allocation3], 0
    // Predicated region
    $region2: #{tpu_custom_call.1} parent=1 // pred_check
      _
    $region3: #{tpu_custom_call.1} parent=1 // pred_check_branch
      %9 = sbr.rel (0) target = $region5
    $region4: #{tpu_custom_call.1} parent=1 // pred_region
      _
    $region5: #{tpu_custom_call.1} parent=1 // pred_fallthru
      _
    // Predicated region
    $region6: #{tpu_custom_call.1} parent=1 // pred_check
      _
    $region7: #{tpu_custom_call.1} parent=1 // pred_check_branch
      %11 = sbr.rel (0) target = $region9
    $region8: #{tpu_custom_call.1} parent=1 // pred_region
      _
    $region9: #{tpu_custom_call.1} parent=1 // pred_fallthru
      _
    %v12 = vld [vmem:[%s1] sm:$0xff]
    %v13 = vld [vmem:[%s1 + $0x10] sm:$0xff]
    %v14 = vld [vmem:[%s1 + $0x20] sm:$0xff]
    %v15 = vld [vmem:[%s1 + $0x30] sm:$0xff]
    %v16 = vld [vmem:[%s1 + $0x40] sm:$0xff]
    %v17 = vld [vmem:[%s1 + $0x50] sm:$0xff]
    %v18 = vld [vmem:[%s1 + $0x60] sm:$0xff]
    %v19 = vld [vmem:[%s1 + $0x70] sm:$0xff]
    %v20 = vld [vmem:[%s1 + $0x80] sm:$0xff]
    %v21 = vld [vmem:[%s1 + $0x88] sm:$0xff]
    %v22 = vld [vmem:[%s1 + $0x90] sm:$0xff]
    %v23 = vld [vmem:[%s1 + $0x98] sm:$0xff]
    %v24 = vld [vmem:[%s1 + $0xa0] sm:$0xff]
    %v25 = vld [vmem:[%s1 + $0xa8] sm:$0xff]
    %v26 = vld [vmem:[%s1 + $0xb0] sm:$0x3f]
    %v27 = vld [vmem:[%s1 + $0xb8] sm:$0x3f]
    %v28 = vld [vmem:[%s1 + $0xc0] sm:$0xf]
    %v29 = vld [vmem:[%s1 + $0xc8] sm:$0xf]
    %v30 = vld [vmem:[%s0] sm:$0xf]
    %v32 = vunpack.c.l.s4 1966171168
    %v33 = vunpack.c.0.s8 %v32
    %v34 = vlaneseq
    %v35 = vshrl.u32 %v34, 7
    %v36 = vsub.s32 %v33, %v35
    %v37 = vrot.slane %v30, %v36
    %v38 = vcombine.high %v37, %v37
    %v40 = vunpack.c.l.s4 1966171168
    %v41 = vunpack.c.0.s8 %v40
    %v42 = vlaneseq
    %v43 = vshrl.u32 %v42, 7
    %v44 = vsub.s32 %v41, %v43
    %v45 = vrot.slane %v37, %v44
    %v47 = vunpack.c.l.s4 1966171168
    %v48 = vunpack.c.0.s8 %v47
    %v49 = vlaneseq
    %v50 = vshrl.u32 %v49, 7
    %v51 = vsub.s32 %v48, %v50
    %v52 = vrot.slane %v38, %v51
    %v53 = vcombine.high %v45, %v45
    %v54 = vcombine.high %v52, %v52
    %v55 = vlaneseq
    %v56 = vshrl.u32 %v55, 7
    %v57 = vadd.s32 %v56, 8
    %v58 = vadd.s32 %v56, 16
    %v59 = vadd.s32 %v56, 24
    %v60 = vadd.s32 %v56, 32
    %v61 = vadd.s32 %v56, 40
    %v62 = vadd.s32 %v56, 48
    %v63 = vadd.s32 %v56, 56
    %v64 = vlaneseq
    %v65 = vshrl.u32 %v64, 7
    %v66 = vsub.s32 0, %v65
    %v67 = vrot.slane %v45, %v66
    %v68 = vlaneseq
    %v69 = vshrl.u32 %v68, 7
    %v70 = vsub.s32 0, %v69
    %v71 = vrot.slane %v52, %v70
    %v72 = vlaneseq
    %v73 = vshrl.u32 %v72, 7
    %v74 = vsub.s32 0, %v73
    %v75 = vrot.slane %v53, %v74
    %v76 = vlaneseq
    %v77 = vshrl.u32 %v76, 7
    %v78 = vsub.s32 0, %v77
    %v79 = vrot.slane %v54, %v78
    %vm80 = vcmp.eq.s32.totalorder %v67, %v56
    %vm81 = vcmp.eq.s32.totalorder %v67, %v57
    %vm82 = vcmp.eq.s32.totalorder %v67, %v58
    %vm83 = vcmp.eq.s32.totalorder %v67, %v59
    %vm84 = vcmp.eq.s32.totalorder %v67, %v60
    %vm85 = vcmp.eq.s32.totalorder %v67, %v61
    %vm86 = vcmp.eq.s32.totalorder %v67, %v62
    %vm87 = vcmp.eq.s32.totalorder %v67, %v63
    %vm88 = vcmp.eq.s32.totalorder %v71, %v56
    %vm89 = vcmp.eq.s32.totalorder %v71, %v57
    %vm90 = vcmp.eq.s32.totalorder %v71, %v58
    %vm91 = vcmp.eq.s32.totalorder %v71, %v59
    %vm92 = vcmp.eq.s32.totalorder %v71, %v60
    %vm93 = vcmp.eq.s32.totalorder %v71, %v61
    %vm94 = vcmp.eq.s32.totalorder %v71, %v62
    %vm95 = vcmp.eq.s32.totalorder %v71, %v63
    %vm96 = vcmp.eq.s32.totalorder %v75, %v56
    %vm97 = vcmp.eq.s32.totalorder %v75, %v57
    %vm98 = vcmp.eq.s32.totalorder %v75, %v58
    %vm99 = vcmp.eq.s32.totalorder %v75, %v59
    %vm100 = vcmp.eq.s32.totalorder %v75, %v60
    %vm101 = vcmp.eq.s32.totalorder %v75, %v61
    %vm102 = vcmp.eq.s32.totalorder %v75, %v62
    %vm103 = vcmp.eq.s32.totalorder %v75, %v63
    %vm104 = vcmp.eq.s32.totalorder %v79, %v56
    %vm105 = vcmp.eq.s32.totalorder %v79, %v57
    %vm106 = vcmp.eq.s32.totalorder %v79, %v58
    %vm107 = vcmp.eq.s32.totalorder %v79, %v59
    %vm108 = vcmp.eq.s32.totalorder %v79, %v60
    %vm109 = vcmp.eq.s32.totalorder %v79, %v61
    %vm110 = vcmp.eq.s32.totalorder %v79, %v62
    %vm111 = vcmp.eq.s32.totalorder %v79, %v63
    %113 = vset.pattern.permute.xlu0 0
    %114 = vperm.xlu0 %113, %v12
    %v115 = vpop.permute.xlu0 %114
    %118 = vset.pattern.permute.xlu0 0
    %119 = vperm.xlu0 %118, %v13
    %v120 = vpop.permute.xlu0 %119
    %123 = vset.pattern.permute.xlu0 0
    %124 = vperm.xlu0 %123, %v14
    %v125 = vpop.permute.xlu0 %124
    %128 = vset.pattern.permute.xlu0 0
    %129 = vperm.xlu0 %128, %v15
    %v130 = vpop.permute.xlu0 %129
    %133 = vset.pattern.permute.xlu0 0
    %134 = vperm.xlu0 %133, %v16
    %v135 = vpop.permute.xlu0 %134
    %138 = vset.pattern.permute.xlu0 0
    %139 = vperm.xlu0 %138, %v17
    %v140 = vpop.permute.xlu0 %139
    %143 = vset.pattern.permute.xlu0 0
    %144 = vperm.xlu0 %143, %v18
    %v145 = vpop.permute.xlu0 %144
    %148 = vset.pattern.permute.xlu0 0
    %149 = vperm.xlu0 %148, %v19
    %v150 = vpop.permute.xlu0 %149
    %v152 = vsel %vm80, %v115, 0.0
    %v153 = vsel %vm81, %v120, 0.0
    %v154 = vsel %vm82, %v125, 0.0
    %v155 = vsel %vm83, %v130, 0.0
    %v156 = vsel %vm84, %v135, 0.0
    %v157 = vsel %vm85, %v140, 0.0
    %v158 = vsel %vm86, %v145, 0.0
    %v159 = vsel %vm87, %v150, 0.0
    %v160 = vsel %vm88, %v115, 0.0
    %v161 = vsel %vm89, %v120, 0.0
    %v162 = vsel %vm90, %v125, 0.0
    %v163 = vsel %vm91, %v130, 0.0
    %v164 = vsel %vm92, %v135, 0.0
    %v165 = vsel %vm93, %v140, 0.0
    %v166 = vsel %vm94, %v145, 0.0
    %v167 = vsel %vm95, %v150, 0.0
    %v168 = vsel %vm96, %v115, 0.0
    %v169 = vsel %vm97, %v120, 0.0
    %v170 = vsel %vm98, %v125, 0.0
    %v171 = vsel %vm99, %v130, 0.0
    %v172 = vsel %vm100, %v135, 0.0
    %v173 = vsel %vm101, %v140, 0.0
    %v174 = vsel %vm102, %v145, 0.0
    %v175 = vsel %vm103, %v150, 0.0
    %v176 = vsel %vm104, %v115, 0.0
    %v177 = vsel %vm105, %v120, 0.0
    %v178 = vsel %vm106, %v125, 0.0
    %v179 = vsel %vm107, %v130, 0.0
    %v180 = vsel %vm108, %v135, 0.0
    %v181 = vsel %vm109, %v140, 0.0
    %v182 = vsel %vm110, %v145, 0.0
    %v183 = vsel %vm111, %v150, 0.0
    %vm184 = vcmask 244736
    %v185 = vsel %vm184, %v152, 0.0
    %v186 = vsel %vm184, %v153, 0.0
    %v187 = vadd.f32 %v185, %v186
    %v188 = vsel %vm184, %v154, 0.0
    %v189 = vadd.f32 %v187, %v188
    %v190 = vsel %vm184, %v155, 0.0
    %v191 = vadd.f32 %v189, %v190
    %v192 = vsel %vm184, %v156, 0.0
    %v193 = vadd.f32 %v191, %v192
    %v194 = vsel %vm184, %v157, 0.0
    %v195 = vadd.f32 %v193, %v194
    %v196 = vsel %vm184, %v158, 0.0
    %v197 = vadd.f32 %v195, %v196
    %v198 = vsel %vm184, %v159, 0.0
    %v199 = vadd.f32 %v197, %v198
    %v200 = vrot.slane %v199, 4
    %v201 = vadd.f32 %v199, %v200
    %v202 = vrot.slane %v201, 2
    %v203 = vadd.f32 %v201, %v202
    %v204 = vrot.slane %v203, 1
    %v205 = vadd.f32 %v203, %v204
    %v206 = vsel %vm184, %v160, 0.0
    %v207 = vsel %vm184, %v161, 0.0
    %v208 = vadd.f32 %v206, %v207
    %v209 = vsel %vm184, %v162, 0.0
    %v210 = vadd.f32 %v208, %v209
    %v211 = vsel %vm184, %v163, 0.0
    %v212 = vadd.f32 %v210, %v211
    %v213 = vsel %vm184, %v164, 0.0
    %v214 = vadd.f32 %v212, %v213
    %v215 = vsel %vm184, %v165, 0.0
    %v216 = vadd.f32 %v214, %v215
    %v217 = vsel %vm184, %v166, 0.0
    %v218 = vadd.f32 %v216, %v217
    %v219 = vsel %vm184, %v167, 0.0
    %v220 = vadd.f32 %v218, %v219
    %v221 = vrot.slane %v220, 4
    %v222 = vadd.f32 %v220, %v221
    %v223 = vrot.slane %v222, 2
    %v224 = vadd.f32 %v222, %v223
    %v225 = vrot.slane %v224, 1
    %v226 = vadd.f32 %v224, %v225
    %v227 = vsel %vm184, %v168, 0.0
    %v228 = vsel %vm184, %v169, 0.0
    %v229 = vadd.f32 %v227, %v228
    %v230 = vsel %vm184, %v170, 0.0
    %v231 = vadd.f32 %v229, %v230
    %v232 = vsel %vm184, %v171, 0.0
    %v233 = vadd.f32 %v231, %v232
    %v234 = vsel %vm184, %v172, 0.0
    %v235 = vadd.f32 %v233, %v234
    %v236 = vsel %vm184, %v173, 0.0
    %v237 = vadd.f32 %v235, %v236
    %v238 = vsel %vm184, %v174, 0.0
    %v239 = vadd.f32 %v237, %v238
    %v240 = vsel %vm184, %v175, 0.0
    %v241 = vadd.f32 %v239, %v240
    %v242 = vrot.slane %v241, 4
    %v243 = vadd.f32 %v241, %v242
    %v244 = vrot.slane %v243, 2
    %v245 = vadd.f32 %v243, %v244
    %v246 = vrot.slane %v245, 1
    %v247 = vadd.f32 %v245, %v246
    %v248 = vsel %vm184, %v176, 0.0
    %v249 = vsel %vm184, %v177, 0.0
    %v250 = vadd.f32 %v248, %v249
    %v251 = vsel %vm184, %v178, 0.0
    %v252 = vadd.f32 %v250, %v251
    %v253 = vsel %vm184, %v179, 0.0
    %v254 = vadd.f32 %v252, %v253
    %v255 = vsel %vm184, %v180, 0.0
    %v256 = vadd.f32 %v254, %v255
    %v257 = vsel %vm184, %v181, 0.0
    %v258 = vadd.f32 %v256, %v257
    %v259 = vsel %vm184, %v182, 0.0
    %v260 = vadd.f32 %v258, %v259
    %v261 = vsel %vm184, %v183, 0.0
    %v262 = vadd.f32 %v260, %v261
    %v263 = vrot.slane %v262, 4
    %v264 = vadd.f32 %v262, %v263
    %v265 = vrot.slane %v264, 2
    %v266 = vadd.f32 %v264, %v265
    %v267 = vrot.slane %v266, 1
    %v268 = vadd.f32 %v266, %v267
    %vm273 = vcmask 1041409
    %v274 = vsel %vm273, %v226, %v205
    %vm275 = vcmask 1042434
    %v276 = vsel %vm275, %v247, %v274
    %vm277 = vcmask 1043459
    %v278 = vsel %vm277, %v268, %v276
    %v279 = vsel %vm184, %v278, 0
    %vm281 = vcmask 1045504
    %v283 = vsel %vm281, %v26, 0
    %v286 = vsel %vm281, %v27, 0
    %288 = vmatprep.subr.mxu0 %v21
    %289 = vmatpush1.msra.mxu0 %v20
    %290 = vmatprep.subr.mxu0 %v23
    %291 = vmatpush1.msra.mxu0 %v22
    %292 = vmatprep.subr.mxu0 %v25
    %293 = vmatpush1.msra.mxu0 %v24
    %294 = vmatprep.subr.mxu0 %v286
    %295 = vmatpush1.msra.mxu0 %v283
    %296 = vmatprep.subr.mxu0 0.0
    %297 = vmatpush1.msra.mxu0 0.0
    %298 = vmatprep.subr.mxu0 0.0
    %299 = vmatpush1.msra.mxu0 0.0
    %300 = vmatprep.subr.mxu0 0.0
    %301 = vmatpush1.msra.mxu0 0.0
    %302 = vmatprep.subr.mxu0 0.0
    %303 = vmatpush1.msra.mxu0 0.0
    %304 = vmatprep.subr.mxu0 0.0
    %305 = vmatpush1.msra.mxu0 0.0
    %306 = vmatprep.subr.mxu0 0.0
    %307 = vmatpush1.msra.mxu0 0.0
    %308 = vmatprep.subr.mxu0 0.0
    %309 = vmatpush1.msra.mxu0 0.0
    %310 = vmatprep.subr.mxu0 0.0
    %311 = vmatpush1.msra.mxu0 0.0
    %312 = vmatprep.subr.mxu0 0.0
    %313 = vmatpush1.msra.mxu0 0.0
    %314 = vmatprep.subr.mxu0 0.0
    %315 = vmatpush1.msra.mxu0 0.0
    %316 = vmatprep.subr.mxu0 0.0
    %317 = vmatpush1.msra.mxu0 0.0
    %318 = vmatprep.subr.mxu0 0.0
    %319 = vmatpush1.msra.mxu0 0.0
    %320 = vmatprep.subr.mxu0 0.0
    %321 = vmatpush1.msra.mxu0 0.0
    %322 = vmatprep.subr.mxu0 0.0
    %323 = vmatpush1.msra.mxu0 0.0
    %324 = vmatprep.subr.mxu0 0.0
    %325 = vmatpush1.msra.mxu0 0.0
    %326 = vmatprep.subr.mxu0 0.0
    %327 = vmatpush1.msra.mxu0 0.0
    %328 = vmatprep.subr.mxu0 0.0
    %329 = vmatpush1.msra.mxu0 0.0
    %330 = vmatprep.subr.mxu0 0.0
    %331 = vmatpush1.msra.mxu0 0.0
    %332 = vmatprep.subr.mxu0 0.0
    %333 = vmatpush1.msra.mxu0 0.0
    %334 = vmatprep.subr.mxu0 0.0
    %335 = vmatpush1.msra.mxu0 0.0
    %336 = vmatprep.subr.mxu0 0.0
    %337 = vmatpush1.msra.mxu0 0.0
    %338 = vmatprep.subr.mxu0 0.0
    %339 = vmatpush1.msra.mxu0 0.0
    %340 = vmatprep.subr.mxu0 0.0
    %341 = vmatpush1.msra.mxu0 0.0
    %342 = vmatprep.subr.mxu0 0.0
    %343 = vmatpush1.msra.mxu0 0.0
    %344 = vmatprep.subr.mxu0 0.0
    %345 = vmatpush1.msra.mxu0 0.0
    %346 = vmatprep.subr.mxu0 0.0
    %347 = vmatpush1.msra.mxu0 0.0
    %348 = vmatprep.subr.mxu0 0.0
    %349 = vmatpush1.msra.mxu0 0.0
    %350 = vmatprep.subr.mxu0 0.0
    %351 = vmatpush1.msra.mxu0 0.0
    %352 = vmatprep.mubr.f32.mxu0 0.0
    %353 = vmatmul.mubr.f32.gmra.mrb[0].mxu0 %v279
    %v354 = vpop.f32.mrb[0].mxu0
    %v355 = vadd.f32 %v28, %v354
    %v356 = vpop.f32.mrb[0].mxu0
    %v357 = vadd.f32 %v29, %v356
    %358 = vdwg.mxu0
    %vm359 = vcmask 1043456
    %v360 = vsel %vm359, %v355, -inf
    %vm361 = vcmask 175104
    %v362 = vsel %vm361, %v357, -inf
    %v363 = vmax.f32 %v360, %v362
    %364 = vmax.xlane.f32.xlu0 %v363
    %v365 = vpop.xlane.xlu0 %364
    %v366 = vsub.f32 %v355, %v365
    %v367 = vsub.f32 %v357, %v365
    %v368 = vmul.f32 %v366, 1.442695
    %v369 = vpow.pop %v368
    %v370 = vmul.f32 %v367, 1.442695
    %v371 = vpow.pop %v370
    %v372 = vsel %vm359, %v369, 0.0
    %v373 = vsel %vm361, %v371, 0.0
    %v374 = vadd.f32 %v372, %v373
    %375 = vadd.xlane.f32.xlu0 %v374
    %v376 = vpop.xlane.xlu0 %375
    %v377 = vrcp.pop %v376
    %v378 = vmul.f32 1.0, %v377
    %v379 = vmul.f32 %v369, %v378
    %v380 = vmul.f32 %v371, %v378
    %v383 = vcombine.low %v379, %v380
    %vm385 = vcmask 179204
    %vm386 = vmor %vm385, %vm359
    %387 = vst.msk [vmem:[#allocation2] sm:$0xff] %vm386, %v383
    // Predicated region
    $region10: #{tpu_custom_call.1} parent=1 // pred_check
      _
    $region11: #{tpu_custom_call.1} parent=1 // pred_check_branch
      %389 = sbr.rel (0) target = $region13
    $region12: #{tpu_custom_call.1} parent=1 // pred_region
      %s391 = ssub.s32 128, 128
      %392 = vsyncadd [#allocation3], %s391
      %s394 = sshll.u32 [#allocation2], 4
      %s395 = int_to_ptr.vmem [resolvable:$true] %s394
      %397 = dma.vmem_to_hbm [thread:$0]  %s395, 128, %s2, [#allocation3]
    $region13: #{tpu_custom_call.1} parent=1 // pred_fallthru
      _
    // Predicated region
    $region14: #{tpu_custom_call.1} parent=1 // pred_check
      _
    $region15: #{tpu_custom_call.1} parent=1 // pred_check_branch
      %399 = sbr.rel (0) target = $region17
    $region16: #{tpu_custom_call.1} parent=1 // pred_region
      %400 = dma.done [#allocation3], 128
    $region17: #{tpu_custom_call.1} parent=1 // pred_fallthru
      _
    %401 = vsyncpa [#allocation3], 1

</llo_original>
